<compile_context>
chip_gen: v5e
topology: v5e:2x2
jax: 0.10.0
libtpu: 0.0.40
codegen_flags: <defaults>
</compile_context>

<pallas_src>
import jax
import jax.numpy as jnp
from jax.experimental import pallas as pl
from jax.experimental.pallas import tpu as pltpu


def _fused_convt_kernel(x_ref, s_ref, wm_ref, ws_ref, bm_ref, bs_ref, om_ref, os_ref):
    """One grid step: (C_in, TP) x/skip tiles -> two (4*C_out, TP) output tiles.

    Channels live on sublanes, pixels on lanes, so the NCHW input is consumed
    as-is and both dots are zero-free MXU matmuls with K = C_in.
    """
    x = x_ref[0]          # (C_in, TP)
    s = s_ref[0]          # (C_in, TP)
    acc_m = jnp.dot(wm_ref[...], x, preferred_element_type=jnp.float32) + bm_ref[...]
    acc_s = jnp.dot(ws_ref[...], s, preferred_element_type=jnp.float32) + bs_ref[...]
    om_ref[0] = acc_m.astype(om_ref.dtype)
    os_ref[0] = acc_s.astype(os_ref.dtype)


def _pick_pixel_tile(hw, bytes_per_col, budget_bytes):
    """Largest pixel tile (lane width) dividing H*W whose double-buffered working
    set fits `budget_bytes`.  Prefers multiples of 128 (unmasked stores)."""
    max_tp = max(1, budget_bytes // max(1, bytes_per_col))
    if hw <= max_tp:
        return hw
    best, best_128 = 1, 0
    for tp in range(1, max_tp + 1):
        if hw % tp == 0:
            best = tp
            if tp % 128 == 0:
                best_128 = tp
    return best_128 if best_128 else best


def _weight_rows(w):
    """(C_in, C_out, 2, 2) -> (4*C_out, C_in) with rows ordered (ki, kj, co)."""
    c_in, c_out = w.shape[0], w.shape[1]
    return jnp.transpose(w, (2, 3, 1, 0)).reshape(4 * c_out, c_in)


def _to_nchw(cols, n, h, w, c_out):
    """(N, 4*C_out, H*W) kernel output -> (N, C_out, 2H, 2W).

    Rows are (ki, kj, co), columns are (h, w); the only materializing XLA op is
    the single 6-D transpose (the NCHW interface transpose)."""
    o = cols.reshape(n, 2, 2, c_out, h, w)
    o = jnp.transpose(o, (0, 3, 4, 1, 5, 2))          # (N, C_out, H, ki, W, kj)
    return o.reshape(n, c_out, 2 * h, 2 * w)


def upsample_block(x, skip, params, *, vmem_tile_budget=16 * 1024 * 1024):
    """Forward pass of UpsampleBlock (both ConvTranspose2d fused in one kernel).

    x, skip : (N, C_in, H, W)  (PyTorch NCHW convention)
    returns : two (N, C_in//2, 2H, 2W) tensors.
    """
    w_main, b_main = params["main_w"], params["main_b"]
    w_skip, b_skip = params["skip_w"], params["skip_b"]

    N, C_in, H, W = x.shape
    C_out = w_main.shape[1]
    rows_out = 4 * C_out           # (ki, kj, co) output rows per conv
    HW = H * W
    dtype = x.dtype
    itemsize = jnp.dtype(dtype).itemsize

    # NCHW consumed directly: merging the trailing (H, W) dims is a free bitcast.
    x3 = x.reshape(N, C_in, HW)
    s3 = skip.reshape(N, C_in, HW)

    # Weights as (4*C_out, C_in) matmul LHS (rows ordered ki, kj, co); bias per row.
    wm = _weight_rows(w_main).astype(dtype)
    ws = _weight_rows(w_skip).astype(dtype)
    bm = jnp.tile(b_main, 4).astype(jnp.float32).reshape(rows_out, 1)
    bs = jnp.tile(b_skip, 4).astype(jnp.float32).reshape(rows_out, 1)

    # Pixel-tile (lane) width: whole image unless VMEM budget says otherwise.
    bytes_per_col = 2 * (2 * C_in + 2 * rows_out) * itemsize   # double-buffered in+out
    tp = _pick_pixel_tile(HW, bytes_per_col, vmem_tile_budget)
    grid = (N, HW // tp)

    flops = 4 * N * HW * rows_out * C_in                       # both convs, 2 flops/MAC
    bytes_accessed = (2 * N * C_in * HW + 2 * N * rows_out * HW) * itemsize \
        + 2 * rows_out * C_in * itemsize + 2 * rows_out * 4

    out_m, out_s = pl.pallas_call(
        _fused_convt_kernel,
        out_shape=(jax.ShapeDtypeStruct((N, rows_out, HW), dtype),
                   jax.ShapeDtypeStruct((N, rows_out, HW), dtype)),
        grid=grid,
        in_specs=[
            pl.BlockSpec((1, C_in, tp), lambda n, t: (n, 0, t)),       # x tile
            pl.BlockSpec((1, C_in, tp), lambda n, t: (n, 0, t)),       # skip tile
            pl.BlockSpec((rows_out, C_in), lambda n, t: (0, 0)),       # main weight (resident)
            pl.BlockSpec((rows_out, C_in), lambda n, t: (0, 0)),       # skip weight (resident)
            pl.BlockSpec((rows_out, 1), lambda n, t: (0, 0)),          # main bias  (resident)
            pl.BlockSpec((rows_out, 1), lambda n, t: (0, 0)),          # skip bias  (resident)
        ],
        out_specs=[
            pl.BlockSpec((1, rows_out, tp), lambda n, t: (n, 0, t)),
            pl.BlockSpec((1, rows_out, tp), lambda n, t: (n, 0, t)),
        ],
        compiler_params=pltpu.CompilerParams(
            dimension_semantics=("parallel", "parallel"),
            vmem_limit_bytes=32 * 1024 * 1024,
        ),
        cost_estimate=pl.CostEstimate(
            flops=flops, transcendentals=0, bytes_accessed=bytes_accessed),
    )(x3, s3, wm, ws, bm, bs)

    return _to_nchw(out_m, N, H, W, C_out), _to_nchw(out_s, N, H, W, C_out)


def _reference_convt(x_nchw, w, b):
    """Pure-JAX reference (same math, no Pallas)."""
    x_nhwc = jnp.transpose(x_nchw, (0, 2, 3, 1))
    out = jnp.einsum("nhwc,cdij->nhwijd", x_nhwc, w) + b   # (N,H,W,ki,kj,Cout)
    N, H, W = x_nhwc.shape[:3]
    C_out = w.shape[1]
    out = jnp.transpose(out, (0, 5, 1, 3, 2, 4)).reshape(N, C_out, 2 * H, 2 * W)
    return out


if __name__ == "__main__":
    key = jax.random.PRNGKey(0)
    k_x, k_s, k_w1, k_b1, k_w2, k_b2 = jax.random.split(key, 6)

    batch, hidden, spatial = 2, 32, 16
    x = jax.random.normal(k_x, (batch, hidden, spatial, spatial), jnp.float32)
    skip = jax.random.normal(k_s, (batch, hidden, spatial, spatial), jnp.float32)

    # ConvTranspose2d weight shape: (in, out, kH, kW)
    params = {
        "main_w": 0.1 * jax.random.normal(k_w1, (hidden, hidden // 2, 2, 2), jnp.float32),
        "main_b": 0.1 * jax.random.normal(k_b1, (hidden // 2,), jnp.float32),
        "skip_w": 0.1 * jax.random.normal(k_w2, (hidden, hidden // 2, 2, 2), jnp.float32),
        "skip_b": 0.1 * jax.random.normal(k_b2, (hidden // 2,), jnp.float32),
    }

    x_out, skip_out = jax.jit(upsample_block)(x, skip, params)
    jax.block_until_ready((x_out, skip_out))

    assert x_out.shape == (batch, hidden // 2, 2 * spatial, 2 * spatial)
    assert skip_out.shape == (batch, hidden // 2, 2 * spatial, 2 * spatial)

    # Verify against the pure-JAX reference.
    ref_x = _reference_convt(x, params["main_w"], params["main_b"])
    ref_s = _reference_convt(skip, params["skip_w"], params["skip_b"])
    assert jnp.allclose(x_out, ref_x, atol=1e-5, rtol=1e-5)
    assert jnp.allclose(skip_out, ref_s, atol=1e-5, rtol=1e-5)

    print("KERNEL_OK")
</pallas_src>

<mosaic_0001>
module attributes {stable_mosaic.version = 11 : i64} {
  func.func @_fused_convt_kernel(%arg0: i32, %arg1: i32, %arg2: memref<1x32x256xf32, #tpu.memory_space<vmem>>, %arg3: memref<1x32x256xf32, #tpu.memory_space<vmem>>, %arg4: memref<64x32xf32, #tpu.memory_space<vmem>>, %arg5: memref<64x32xf32, #tpu.memory_space<vmem>>, %arg6: memref<64x1xf32, #tpu.memory_space<vmem>>, %arg7: memref<64x1xf32, #tpu.memory_space<vmem>>, %arg8: memref<1x64x256xf32, #tpu.memory_space<vmem>>, %arg9: memref<1x64x256xf32, #tpu.memory_space<vmem>>) attributes {dimension_semantics = [#tpu.dimension_semantics<parallel>, #tpu.dimension_semantics<parallel>], iteration_bounds = array<i64: 2, 1>, scalar_prefetch = 0 : i64, scratch_operands = 0 : i64, tpu.core_type = #tpu.core_type<tc>, window_params = [{transform_indices = @transform_0, window_bounds = array<i64: 1, 32, 256>}, {transform_indices = @transform_1, window_bounds = array<i64: 1, 32, 256>}, {pipeline_mode = #tpu.pipeline_mode<synchronous>, transform_indices = @transform_2, window_bounds = array<i64: 64, 32>}, {pipeline_mode = #tpu.pipeline_mode<synchronous>, transform_indices = @transform_3, window_bounds = array<i64: 64, 32>}, {pipeline_mode = #tpu.pipeline_mode<synchronous>, transform_indices = @transform_4, window_bounds = array<i64: 64, 1>}, {pipeline_mode = #tpu.pipeline_mode<synchronous>, transform_indices = @transform_5, window_bounds = array<i64: 64, 1>}, {transform_indices = @transform_6, window_bounds = array<i64: 1, 64, 256>}, {transform_indices = @transform_7, window_bounds = array<i64: 1, 64, 256>}]} {
    %c0 = arith.constant 0 : index
    %c0_0 = arith.constant 0 : index
    %c0_1 = arith.constant 0 : index
    %0 = vector.load %arg2[%c0, %c0_0, %c0_1] : memref<1x32x256xf32, #tpu.memory_space<vmem>>, vector<1x32x256xf32>
    %1 = vector.shape_cast %0 : vector<1x32x256xf32> to vector<32x256xf32>
    %c0_2 = arith.constant 0 : index
    %c0_3 = arith.constant 0 : index
    %c0_4 = arith.constant 0 : index
    %2 = vector.load %arg3[%c0_2, %c0_3, %c0_4] : memref<1x32x256xf32, #tpu.memory_space<vmem>>, vector<1x32x256xf32>
    %3 = vector.shape_cast %2 : vector<1x32x256xf32> to vector<32x256xf32>
    %c0_5 = arith.constant 0 : index
    %c0_6 = arith.constant 0 : index
    %4 = vector.load %arg4[%c0_5, %c0_6] : memref<64x32xf32, #tpu.memory_space<vmem>>, vector<64x32xf32>
    %cst = arith.constant dense<0.000000e+00> : vector<64x256xf32>
    %5 = tpu.matmul %4, %1, %cst {dimension_numbers = #tpu.dot_dimension_numbers<[1], [0], [0], [1], [0, 0, 1, 1], [], []>} : vector<64x32xf32>, vector<32x256xf32>, vector<64x256xf32> -> vector<64x256xf32>
    %c0_7 = arith.constant 0 : index
    %c0_8 = arith.constant 0 : index
    %6 = vector.load %arg6[%c0_7, %c0_8] : memref<64x1xf32, #tpu.memory_space<vmem>>, vector<64x1xf32>
    %7 = vector.broadcast %6 : vector<64x1xf32> to vector<64x256xf32>
    %8 = arith.addf %5, %7 : vector<64x256xf32>
    %c0_9 = arith.constant 0 : index
    %c0_10 = arith.constant 0 : index
    %9 = vector.load %arg5[%c0_9, %c0_10] : memref<64x32xf32, #tpu.memory_space<vmem>>, vector<64x32xf32>
    %cst_11 = arith.constant dense<0.000000e+00> : vector<64x256xf32>
    %10 = tpu.matmul %9, %3, %cst_11 {dimension_numbers = #tpu.dot_dimension_numbers<[1], [0], [0], [1], [0, 0, 1, 1], [], []>} : vector<64x32xf32>, vector<32x256xf32>, vector<64x256xf32> -> vector<64x256xf32>
    %c0_12 = arith.constant 0 : index
    %c0_13 = arith.constant 0 : index
    %11 = vector.load %arg7[%c0_12, %c0_13] : memref<64x1xf32, #tpu.memory_space<vmem>>, vector<64x1xf32>
    %12 = vector.broadcast %11 : vector<64x1xf32> to vector<64x256xf32>
    %13 = arith.addf %10, %12 : vector<64x256xf32>
    %c0_14 = arith.constant 0 : index
    %c0_15 = arith.constant 0 : index
    %c0_16 = arith.constant 0 : index
    %14 = vector.load %arg8[%c0_14, %c0_15, %c0_16] : memref<1x64x256xf32, #tpu.memory_space<vmem>>, vector<1x64x256xf32>
    %15 = vector.shape_cast %14 : vector<1x64x256xf32> to vector<64x256xf32>
    %16 = vector.shape_cast %8 : vector<64x256xf32> to vector<1x64x256xf32>
    tpu.vector_store %arg8[%c0_14, %c0_15, %c0_16], %16 {strides = array<i32>} : memref<1x64x256xf32, #tpu.memory_space<vmem>>, vector<1x64x256xf32>,
    %c0_17 = arith.constant 0 : index
    %c0_18 = arith.constant 0 : index
    %c0_19 = arith.constant 0 : index
    %17 = vector.load %arg9[%c0_17, %c0_18, %c0_19] : memref<1x64x256xf32, #tpu.memory_space<vmem>>, vector<1x64x256xf32>
    %18 = vector.shape_cast %17 : vector<1x64x256xf32> to vector<64x256xf32>
    %19 = vector.shape_cast %13 : vector<64x256xf32> to vector<1x64x256xf32>
    tpu.vector_store %arg9[%c0_17, %c0_18, %c0_19], %19 {strides = array<i32>} : memref<1x64x256xf32, #tpu.memory_space<vmem>>, vector<1x64x256xf32>,
    return
  }
  func.func @transform_0(%arg0: i32, %arg1: i32) -> (i32, i32, i32) {
    %c0_i32 = arith.constant 0 : i32
    %c0_i32_0 = arith.constant 0 : i32
    return %arg0, %c0_i32, %arg1 : i32, i32, i32
  }
  func.func @transform_1(%arg0: i32, %arg1: i32) -> (i32, i32, i32) {
    %c0_i32 = arith.constant 0 : i32
    %c0_i32_0 = arith.constant 0 : i32
    return %arg0, %c0_i32, %arg1 : i32, i32, i32
  }
  func.func @transform_2(%arg0: i32, %arg1: i32) -> (i32, i32) {
    %c0_i32 = arith.constant 0 : i32
    %c0_i32_0 = arith.constant 0 : i32
    %c0_i32_1 = arith.constant 0 : i32
    return %c0_i32, %c0_i32_0 : i32, i32
  }
  func.func @transform_3(%arg0: i32, %arg1: i32) -> (i32, i32) {
    %c0_i32 = arith.constant 0 : i32
    %c0_i32_0 = arith.constant 0 : i32
    %c0_i32_1 = arith.constant 0 : i32
    return %c0_i32, %c0_i32_0 : i32, i32
  }
  func.func @transform_4(%arg0: i32, %arg1: i32) -> (i32, i32) {
    %c0_i32 = arith.constant 0 : i32
    %c0_i32_0 = arith.constant 0 : i32
    %c0_i32_1 = arith.constant 0 : i32
    return %c0_i32, %c0_i32_0 : i32, i32
  }
  func.func @transform_5(%arg0: i32, %arg1: i32) -> (i32, i32) {
    %c0_i32 = arith.constant 0 : i32
    %c0_i32_0 = arith.constant 0 : i32
    %c0_i32_1 = arith.constant 0 : i32
    return %c0_i32, %c0_i32_0 : i32, i32
  }
  func.func @transform_6(%arg0: i32, %arg1: i32) -> (i32, i32, i32) {
    %c0_i32 = arith.constant 0 : i32
    %c0_i32_0 = arith.constant 0 : i32
    return %arg0, %c0_i32, %arg1 : i32, i32, i32
  }
  func.func @transform_7(%arg0: i32, %arg1: i32) -> (i32, i32, i32) {
    %c0_i32 = arith.constant 0 : i32
    %c0_i32_0 = arith.constant 0 : i32
    return %arg0, %c0_i32, %arg1 : i32, i32, i32
  }
}

</mosaic_0001>

<llo_original>
// kernel: tile.13
$region0: #{tile.13}
  #allocation0 [shape = 's32[1]{0}', space=sflag, size = 0x4, scoped, tag = 'scoped memory for tile.13']
  %s0 = inlined_call_operand.vmem [shape: f32[16], index: 0, kind: input, shape index: {}]
  %s1 = inlined_call_operand.vmem [shape: f32[4,16], index: 1, kind: output, shape index: {}]
  // Predicated region
  $region2: #{tile.13} parent=0 // pred_check
    _
  $region3: #{tile.13} parent=0 // pred_check_branch
    %3 = sbr.rel (0) target = $region5
  $region4: #{tile.13} parent=0 // pred_region
    _
  $region5: #{tile.13} parent=0 // pred_fallthru
    _
  %v4 = vld [vmem:[%s0] ss:$0 sm:$0xff]
  %5 = vst [vmem:[%s1] sm:$0xf] %v4

// kernel: tile.1
$region0: #{tile.1}
  %s0 = inlined_call_operand.vmem [shape: f32[4,16], index: 0, kind: input, shape index: {}]
  %s1 = inlined_call_operand.vmem [shape: f32[64,1], index: 1, kind: output, shape index: {}]
  $region1: #{tile.1} parent=0
    #allocation0 [shape = 'u8[4096]{0}', space=vmem, size = 0x1000, scoped, tag = 'scoped mem for input reshape']
    %s3 = ssub.s32 16, 1
    %v4 = vld [vmem:[%s0] sm:%s3]
    %5 = vst [vmem:[#allocation0] sm:%s3] %v4
    %v6 = vld [vmem:[#allocation0] sm:$0xf]
    %vm7 = vcmask 7168
    %8 = vst.msk [vmem:[%s1] ss:$16 sm:$0x3] %vm7, %v6
    %9 = vst.msk [vmem:[%s1] ss:$16 sm:$0xc] %vm7, %v6
    %v10 = vld [vmem:[#allocation0] sm:$0xf]
    %11 = vrot.lane.b32.xlu0 %v10, 127
    %v12 = vpop.permute.xlu0 %11
    %vm13 = vcmask 7168
    %s14 = scalar_lea.vmem %s1, 1
    %15 = vst.msk [vmem:[%s14] ss:$16 sm:$0x3] %vm13, %v12
    %s16 = scalar_lea.vmem %s1, 1
    %17 = vst.msk [vmem:[%s16] ss:$16 sm:$0xc] %vm13, %v12
    %v18 = vld [vmem:[#allocation0] sm:$0xf]
    %19 = vrot.lane.b32.xlu0 %v18, 126
    %v20 = vpop.permute.xlu0 %19
    %vm21 = vcmask 7168
    %s22 = scalar_lea.vmem %s1, 2
    %23 = vst.msk [vmem:[%s22] ss:$16 sm:$0x3] %vm21, %v20
    %s24 = scalar_lea.vmem %s1, 2
    %25 = vst.msk [vmem:[%s24] ss:$16 sm:$0xc] %vm21, %v20
    %v26 = vld [vmem:[#allocation0] sm:$0xf]
    %27 = vrot.lane.b32.xlu0 %v26, 125
    %v28 = vpop.permute.xlu0 %27
    %vm29 = vcmask 7168
    %s30 = scalar_lea.vmem %s1, 3
    %31 = vst.msk [vmem:[%s30] ss:$16 sm:$0x3] %vm29, %v28
    %s32 = scalar_lea.vmem %s1, 3
    %33 = vst.msk [vmem:[%s32] ss:$16 sm:$0xc] %vm29, %v28
    %v34 = vld [vmem:[#allocation0] sm:$0xf]
    %35 = vrot.lane.b32.xlu0 %v34, 124
    %v36 = vpop.permute.xlu0 %35
    %vm37 = vcmask 7168
    %s38 = scalar_lea.vmem %s1, 4
    %39 = vst.msk [vmem:[%s38] ss:$16 sm:$0x3] %vm37, %v36
    %s40 = scalar_lea.vmem %s1, 4
    %41 = vst.msk [vmem:[%s40] ss:$16 sm:$0xc] %vm37, %v36
    %v42 = vld [vmem:[#allocation0] sm:$0xf]
    %43 = vrot.lane.b32.xlu0 %v42, 123
    %v44 = vpop.permute.xlu0 %43
    %vm45 = vcmask 7168
    %s46 = scalar_lea.vmem %s1, 5
    %47 = vst.msk [vmem:[%s46] ss:$16 sm:$0x3] %vm45, %v44
    %s48 = scalar_lea.vmem %s1, 5
    %49 = vst.msk [vmem:[%s48] ss:$16 sm:$0xc] %vm45, %v44
    %v50 = vld [vmem:[#allocation0] sm:$0xf]
    %51 = vrot.lane.b32.xlu0 %v50, 122
    %v52 = vpop.permute.xlu0 %51
    %vm53 = vcmask 7168
    %s54 = scalar_lea.vmem %s1, 6
    %55 = vst.msk [vmem:[%s54] ss:$16 sm:$0x3] %vm53, %v52
    %s56 = scalar_lea.vmem %s1, 6
    %57 = vst.msk [vmem:[%s56] ss:$16 sm:$0xc] %vm53, %v52
    %v58 = vld [vmem:[#allocation0] sm:$0xf]
    %59 = vrot.lane.b32.xlu0 %v58, 121
    %v60 = vpop.permute.xlu0 %59
    %vm61 = vcmask 7168
    %s62 = scalar_lea.vmem %s1, 7
    %63 = vst.msk [vmem:[%s62] ss:$16 sm:$0x3] %vm61, %v60
    %s64 = scalar_lea.vmem %s1, 7
    %65 = vst.msk [vmem:[%s64] ss:$16 sm:$0xc] %vm61, %v60
    %v66 = vld [vmem:[#allocation0] sm:$0xf]
    %67 = vrot.lane.b32.xlu0 %v66, 120
    %v68 = vpop.permute.xlu0 %67
    %vm69 = vcmask 7168
    %s70 = scalar_lea.vmem %s1, 8
    %71 = vst.msk [vmem:[%s70] ss:$16 sm:$0x3] %vm69, %v68
    %s72 = scalar_lea.vmem %s1, 8
    %73 = vst.msk [vmem:[%s72] ss:$16 sm:$0xc] %vm69, %v68
    %v74 = vld [vmem:[#allocation0] sm:$0xf]
    %75 = vrot.lane.b32.xlu0 %v74, 119
    %v76 = vpop.permute.xlu0 %75
    %vm77 = vcmask 7168
    %s78 = scalar_lea.vmem %s1, 9
    %79 = vst.msk [vmem:[%s78] ss:$16 sm:$0x3] %vm77, %v76
    %s80 = scalar_lea.vmem %s1, 9
    %81 = vst.msk [vmem:[%s80] ss:$16 sm:$0xc] %vm77, %v76
    %v82 = vld [vmem:[#allocation0] sm:$0xf]
    %83 = vrot.lane.b32.xlu0 %v82, 118
    %v84 = vpop.permute.xlu0 %83
    %vm85 = vcmask 7168
    %s86 = scalar_lea.vmem %s1, 10
    %87 = vst.msk [vmem:[%s86] ss:$16 sm:$0x3] %vm85, %v84
    %s88 = scalar_lea.vmem %s1, 10
    %89 = vst.msk [vmem:[%s88] ss:$16 sm:$0xc] %vm85, %v84
    %v90 = vld [vmem:[#allocation0] sm:$0xf]
    %91 = vrot.lane.b32.xlu0 %v90, 117
    %v92 = vpop.permute.xlu0 %91
    %vm93 = vcmask 7168
    %s94 = scalar_lea.vmem %s1, 11
    %95 = vst.msk [vmem:[%s94] ss:$16 sm:$0x3] %vm93, %v92
    %s96 = scalar_lea.vmem %s1, 11
    %97 = vst.msk [vmem:[%s96] ss:$16 sm:$0xc] %vm93, %v92
    %v98 = vld [vmem:[#allocation0] sm:$0xf]
    %99 = vrot.lane.b32.xlu0 %v98, 116
    %v100 = vpop.permute.xlu0 %99
    %vm101 = vcmask 7168
    %s102 = scalar_lea.vmem %s1, 12
    %103 = vst.msk [vmem:[%s102] ss:$16 sm:$0x3] %vm101, %v100
    %s104 = scalar_lea.vmem %s1, 12
    %105 = vst.msk [vmem:[%s104] ss:$16 sm:$0xc] %vm101, %v100
    %v106 = vld [vmem:[#allocation0] sm:$0xf]
    %107 = vrot.lane.b32.xlu0 %v106, 115
    %v108 = vpop.permute.xlu0 %107
    %vm109 = vcmask 7168
    %s110 = scalar_lea.vmem %s1, 13
    %111 = vst.msk [vmem:[%s110] ss:$16 sm:$0x3] %vm109, %v108
    %s112 = scalar_lea.vmem %s1, 13
    %113 = vst.msk [vmem:[%s112] ss:$16 sm:$0xc] %vm109, %v108
    %v114 = vld [vmem:[#allocation0] sm:$0xf]
    %115 = vrot.lane.b32.xlu0 %v114, 114
    %v116 = vpop.permute.xlu0 %115
    %vm117 = vcmask 7168
    %s118 = scalar_lea.vmem %s1, 14
    %119 = vst.msk [vmem:[%s118] ss:$16 sm:$0x3] %vm117, %v116
    %s120 = scalar_lea.vmem %s1, 14
    %121 = vst.msk [vmem:[%s120] ss:$16 sm:$0xc] %vm117, %v116
    %v122 = vld [vmem:[#allocation0] sm:$0xf]
    %123 = vrot.lane.b32.xlu0 %v122, 113
    %v124 = vpop.permute.xlu0 %123
    %vm125 = vcmask 7168
    %s126 = scalar_lea.vmem %s1, 15
    %127 = vst.msk [vmem:[%s126] ss:$16 sm:$0x3] %vm125, %v124
    %s128 = scalar_lea.vmem %s1, 15
    %129 = vst.msk [vmem:[%s128] ss:$16 sm:$0xc] %vm125, %v124

// kernel: upsample_block.1
$region0: #{upsample_block.1}
  #allocation0 [shape = 'u32[]', space=smem, size = 0x4, offset = 0x4, fixed_abs, tag = 'smem constant byte address 0x4 - core index']
  #allocation1 [shape = 'u32[72,128]{1,0:T(1,128)}', space=vmem, size = 0x9000, scoped, tag = 'internal scratch']
  %s0 = inlined_call_operand.vmem [shape: f32[2,32,256], index: 0, kind: input, shape index: {}]
  %s1 = inlined_call_operand.vmem [shape: f32[2,32,256], index: 1, kind: input, shape index: {}]
  %s2 = inlined_call_operand.vmem [shape: f32[64,32], index: 2, kind: input, shape index: {}]
  %s3 = inlined_call_operand.vmem [shape: f32[64,32], index: 3, kind: input, shape index: {}]
  %s4 = inlined_call_operand.vmem [shape: f32[64,1], index: 4, kind: input, shape index: {}]
  %s5 = inlined_call_operand.vmem [shape: f32[64,1], index: 5, kind: input, shape index: {}]
  %s6 = inlined_call_operand.vmem [shape: f32[2,64,256], index: 6, kind: output, shape index: {0}]
  %s7 = inlined_call_operand.vmem [shape: f32[2,64,256], index: 7, kind: output, shape index: {1}]
  %8 = xla_tuple %s6, %s7
  %s9 = sld [smem:[#allocation0]]
  $region65: #{upsample_block.1} parent=0
    _
  %s11 = ssub.s32 1, %s9
  %s12 = scalar_select 0, %s11, %s9
  loop: start=0, step=1, limit=4
  $region2: #{upsample_block.1} parent=0 // loop_pre_header
    _
  $region3: #{upsample_block.1} parent=0 // loop_header
    %s14 = sphi 0, %s18
    %p15 = scmp.ge.s32.totalorder %s14, 4
    %s21 = sphi 0, %s33
    %s22 = sphi 0, %s29
    %s23 = sphi 0, %s21
    %s24 = sphi 0, %s22
    %s25 = sphi 0, %s23
    %s26 = sphi 0, %s24
    %s38 = sphi 0, %s40
    %s41 = sphi 0, %s38
    %s42 = sphi 0, %s41
    %s58 = sphi 0, %s42
    %s66 = sphi 0, %s68
    %s69 = sphi 0, %s66
    %s70 = sphi 0, %s69
    %s86 = sphi 0, %s70
    %s90 = sphi 0, %s90
    %s92 = sphi 0, %s90
    %s93 = sphi 0, %s92
    %s107 = sphi 0, %s93
    %s111 = sphi 0, %s111
    %s113 = sphi 0, %s111
    %s114 = sphi 0, %s113
    %s128 = sphi 0, %s114
    %s132 = sphi 0, %s132
    %s134 = sphi 0, %s132
    %s135 = sphi 0, %s134
    %s149 = sphi 0, %s135
    %s153 = sphi 0, %s153
    %s155 = sphi 0, %s153
    %s156 = sphi 0, %s155
    %s170 = sphi 0, %s156
    %s178 = sphi 0, %s180
    %s181 = sphi 0, %s178
    %s182 = sphi 0, %s181
    %s198 = sphi 0, %s182
    %s206 = sphi 0, %s208
    %s209 = sphi 0, %s206
    %s210 = sphi 0, %s209
    %s226 = sphi 0, %s210
  $region4: #{upsample_block.1} parent=0 // loop_header_branch
    %17 = sbr.rel (%p15) target = $region8
  $region5: #{upsample_block.1} parent=0 // loop_body
    %s19 = ssub.s32 %s14, 1
    %s20 = ssub.s32 %s14, 2
    %s27 = sadd.s32 1, %s22
    %p28 = scmp.ge.s32.totalorder %s27, 1
    %s29 = scalar_select %p28, 0, %s27
    %s30 = sadd.s32 1, %s21
    %s31 = scalar_select %p28, %s30, %s21
    %p32 = scmp.ge.s32.totalorder %s31, 2
    %s33 = scalar_select %p32, 0, %s31
    %s34 = ssub.s32 %s21, %s33
    %s35 = ssub.s32 %s22, %s29
    %s36 = sor.u32 %s34, %s35
    %p37 = scmp.eq.s32.totalorder %s36, 0
    %s39 = sadd.s32 %s38, 1
    %s40 = scalar_select %p37, %s38, %s39
    %p43 = pneg %p37
    %p44 = scmp.eq.s32.totalorder %s14, 1
    %p45 = por %p43, %p44
    %p46 = scmp.ne.s32.totalorder %s38, %s41
    %p47 = scmp.eq.s32.totalorder %s14, 0
    %p48 = por %p46, %p47
    %p49 = scmp.ne.s32.totalorder %s38, %s41
    %p50 = scmp.eq.s32.totalorder %s19, 1
    %p51 = por %p49, %p50
    %p52 = scmp.ne.s32.totalorder %s41, %s42
    %p53 = scmp.eq.s32.totalorder %s19, 0
    %p54 = por %p52, %p53
    %p55 = scmp.ne.s32.totalorder %s41, %s42
    %p56 = scmp.eq.s32.totalorder %s20, 1
    %p57 = por %p55, %p56
    %p59 = scmp.ne.s32.totalorder %s42, %s58
    %p60 = scmp.eq.s32.totalorder %s20, 0
    %p61 = por %p59, %p60
    %s62 = ssub.s32 %s21, %s33
    %s63 = ssub.s32 %s22, %s29
    %s64 = sor.u32 %s62, %s63
    %p65 = scmp.eq.s32.totalorder %s64, 0
    %s67 = sadd.s32 %s66, 1
    %s68 = scalar_select %p65, %s66, %s67
    %p71 = pneg %p65
    %p72 = scmp.eq.s32.totalorder %s14, 1
    %p73 = por %p71, %p72
    %p74 = scmp.ne.s32.totalorder %s66, %s69
    %p75 = scmp.eq.s32.totalorder %s14, 0
    %p76 = por %p74, %p75
    %p77 = scmp.ne.s32.totalorder %s66, %s69
    %p78 = scmp.eq.s32.totalorder %s19, 1
    %p79 = por %p77, %p78
    %p80 = scmp.ne.s32.totalorder %s69, %s70
    %p81 = scmp.eq.s32.totalorder %s19, 0
    %p82 = por %p80, %p81
    %p83 = scmp.ne.s32.totalorder %s69, %s70
    %p84 = scmp.eq.s32.totalorder %s20, 1
    %p85 = por %p83, %p84
    %p87 = scmp.ne.s32.totalorder %s70, %s86
    %p88 = scmp.eq.s32.totalorder %s20, 0
    %p89 = por %p87, %p88
    %s91 = sadd.s32 %s90, 1
    %p94 = scmp.eq.s32.totalorder %s14, 1
    %p95 = scmp.ne.s32.totalorder %s90, %s92
    %p96 = scmp.eq.s32.totalorder %s14, 0
    %p97 = por %p95, %p96
    %p98 = scmp.ne.s32.totalorder %s90, %s92
    %p99 = scmp.eq.s32.totalorder %s19, 1
    %p100 = por %p98, %p99
    %p101 = scmp.ne.s32.totalorder %s92, %s93
    %p102 = scmp.eq.s32.totalorder %s19, 0
    %p103 = por %p101, %p102
    %p104 = scmp.ne.s32.totalorder %s92, %s93
    %p105 = scmp.eq.s32.totalorder %s20, 1
    %p106 = por %p104, %p105
    %p108 = scmp.ne.s32.totalorder %s93, %s107
    %p109 = scmp.eq.s32.totalorder %s20, 0
    %p110 = por %p108, %p109
    %s112 = sadd.s32 %s111, 1
    %p115 = scmp.eq.s32.totalorder %s14, 1
    %p116 = scmp.ne.s32.totalorder %s111, %s113
    %p117 = scmp.eq.s32.totalorder %s14, 0
    %p118 = por %p116, %p117
    %p119 = scmp.ne.s32.totalorder %s111, %s113
    %p120 = scmp.eq.s32.totalorder %s19, 1
    %p121 = por %p119, %p120
    %p122 = scmp.ne.s32.totalorder %s113, %s114
    %p123 = scmp.eq.s32.totalorder %s19, 0
    %p124 = por %p122, %p123
    %p125 = scmp.ne.s32.totalorder %s113, %s114
    %p126 = scmp.eq.s32.totalorder %s20, 1
    %p127 = por %p125, %p126
    %p129 = scmp.ne.s32.totalorder %s114, %s128
    %p130 = scmp.eq.s32.totalorder %s20, 0
    %p131 = por %p129, %p130
    %s133 = sadd.s32 %s132, 1
    %p136 = scmp.eq.s32.totalorder %s14, 1
    %p137 = scmp.ne.s32.totalorder %s132, %s134
    %p138 = scmp.eq.s32.totalorder %s14, 0
    %p139 = por %p137, %p138
    %p140 = scmp.ne.s32.totalorder %s132, %s134
    %p141 = scmp.eq.s32.totalorder %s19, 1
    %p142 = por %p140, %p141
    %p143 = scmp.ne.s32.totalorder %s134, %s135
    %p144 = scmp.eq.s32.totalorder %s19, 0
    %p145 = por %p143, %p144
    %p146 = scmp.ne.s32.totalorder %s134, %s135
    %p147 = scmp.eq.s32.totalorder %s20, 1
    %p148 = por %p146, %p147
    %p150 = scmp.ne.s32.totalorder %s135, %s149
    %p151 = scmp.eq.s32.totalorder %s20, 0
    %p152 = por %p150, %p151
    %s154 = sadd.s32 %s153, 1
    %p157 = scmp.eq.s32.totalorder %s14, 1
    %p158 = scmp.ne.s32.totalorder %s153, %s155
    %p159 = scmp.eq.s32.totalorder %s14, 0
    %p160 = por %p158, %p159
    %p161 = scmp.ne.s32.totalorder %s153, %s155
    %p162 = scmp.eq.s32.totalorder %s19, 1
    %p163 = por %p161, %p162
    %p164 = scmp.ne.s32.totalorder %s155, %s156
    %p165 = scmp.eq.s32.totalorder %s19, 0
    %p166 = por %p164, %p165
    %p167 = scmp.ne.s32.totalorder %s155, %s156
    %p168 = scmp.eq.s32.totalorder %s20, 1
    %p169 = por %p167, %p168
    %p171 = scmp.ne.s32.totalorder %s156, %s170
    %p172 = scmp.eq.s32.totalorder %s20, 0
    %p173 = por %p171, %p172
    %s174 = ssub.s32 %s21, %s33
    %s175 = ssub.s32 %s22, %s29
    %s176 = sor.u32 %s174, %s175
    %p177 = scmp.eq.s32.totalorder %s176, 0
    %s179 = sadd.s32 %s178, 1
    %s180 = scalar_select %p177, %s178, %s179
    %p183 = pneg %p177
    %p184 = scmp.eq.s32.totalorder %s14, 1
    %p185 = por %p183, %p184
    %p186 = scmp.ne.s32.totalorder %s178, %s181
    %p187 = scmp.eq.s32.totalorder %s14, 0
    %p188 = por %p186, %p187
    %p189 = scmp.ne.s32.totalorder %s178, %s181
    %p190 = scmp.eq.s32.totalorder %s19, 1
    %p191 = por %p189, %p190
    %p192 = scmp.ne.s32.totalorder %s181, %s182
    %p193 = scmp.eq.s32.totalorder %s19, 0
    %p194 = por %p192, %p193
    %p195 = scmp.ne.s32.totalorder %s181, %s182
    %p196 = scmp.eq.s32.totalorder %s20, 1
    %p197 = por %p195, %p196
    %p199 = scmp.ne.s32.totalorder %s182, %s198
    %p200 = scmp.eq.s32.totalorder %s20, 0
    %p201 = por %p199, %p200
    %s202 = ssub.s32 %s21, %s33
    %s203 = ssub.s32 %s22, %s29
    %s204 = sor.u32 %s202, %s203
    %p205 = scmp.eq.s32.totalorder %s204, 0
    %s207 = sadd.s32 %s206, 1
    %s208 = scalar_select %p205, %s206, %s207
    %p211 = pneg %p205
    %p212 = scmp.eq.s32.totalorder %s14, 1
    %p213 = por %p211, %p212
    %p214 = scmp.ne.s32.totalorder %s206, %s209
    %p215 = scmp.eq.s32.totalorder %s14, 0
    %p216 = por %p214, %p215
    %p217 = scmp.ne.s32.totalorder %s206, %s209
    %p218 = scmp.eq.s32.totalorder %s19, 1
    %p219 = por %p217, %p218
    %p220 = scmp.ne.s32.totalorder %s209, %s210
    %p221 = scmp.eq.s32.totalorder %s19, 0
    %p222 = por %p220, %p221
    %p223 = scmp.ne.s32.totalorder %s209, %s210
    %p224 = scmp.eq.s32.totalorder %s20, 1
    %p225 = por %p223, %p224
    %p227 = scmp.ne.s32.totalorder %s210, %s226
    %p228 = scmp.eq.s32.totalorder %s20, 0
    %p229 = por %p227, %p228
    %p230 = scmp.le.s32.totalorder 1, %s14
    %p231 = scmp.lt.s32.totalorder %s14, 3
    %p232 = pnand %p230, %p231
    %p233 = pneg %p232
    // Predicated region
    $region9: #{upsample_block.1} parent=5 // pred_check
      _
    $region10: #{upsample_block.1} parent=5 // pred_check_branch
      %235 = sbr.rel (%p232) target = $region12
    $region11: #{upsample_block.1} parent=5 // pred_region
      %s236 = ssub.s32 %s14, 1
      // Predicated region
      $region13: #{upsample_block.1} parent=11 // pred_check
        %p237 = pneg %p103
      $region14: #{upsample_block.1} parent=11 // pred_check_branch
        %239 = sbr.rel (%p237) target = $region16
      $region15: #{upsample_block.1} parent=11 // pred_region
        _
      $region16: #{upsample_block.1} parent=11 // pred_fallthru
        _
      // Predicated region
      $region17: #{upsample_block.1} parent=11 // pred_check
        %p240 = pneg %p124
      $region18: #{upsample_block.1} parent=11 // pred_check_branch
        %242 = sbr.rel (%p240) target = $region20
      $region19: #{upsample_block.1} parent=11 // pred_region
        _
      $region20: #{upsample_block.1} parent=11 // pred_fallthru
        _
      // Predicated region
      $region21: #{upsample_block.1} parent=11 // pred_check
        %p243 = pneg %p145
      $region22: #{upsample_block.1} parent=11 // pred_check_branch
        %245 = sbr.rel (%p243) target = $region24
      $region23: #{upsample_block.1} parent=11 // pred_region
        _
      $region24: #{upsample_block.1} parent=11 // pred_fallthru
        _
      // Predicated region
      $region25: #{upsample_block.1} parent=11 // pred_check
        %p246 = pneg %p166
      $region26: #{upsample_block.1} parent=11 // pred_check_branch
        %248 = sbr.rel (%p246) target = $region28
      $region27: #{upsample_block.1} parent=11 // pred_region
        _
      $region28: #{upsample_block.1} parent=11 // pred_fallthru
        _
    $region12: #{upsample_block.1} parent=5 // pred_fallthru
      _
    %p249 = scmp.lt.s32.totalorder %s14, 2
    // Predicated region
    $region29: #{upsample_block.1} parent=5 // pred_check
      %p250 = pneg %p249
    $region30: #{upsample_block.1} parent=5 // pred_check_branch
      %252 = sbr.rel (%p250) target = $region32
    $region31: #{upsample_block.1} parent=5 // pred_region
      // Predicated region
      $region33: #{upsample_block.1} parent=31 // pred_check
        %p253 = pneg %p48
      $region34: #{upsample_block.1} parent=31 // pred_check_branch
        %255 = sbr.rel (%p253) target = $region36
      $region35: #{upsample_block.1} parent=31 // pred_region
        %s256 = smul.u32 2, %s22
        %p257 = scmp.lt.s32.totalorder %s21, 1
        %s258 = scalar_select %p257, %s21, 1
        %p259 = scmp.lt.s32.totalorder %s256, 1
        %s260 = scalar_select %p259, %s256, 1
        %s261 = smul.addr %s258, 8
        %s262 = sadd.s32 %s260, %s261
        %s263 = smul.addr %s262, 8
        %s264 = scalar_lea.vmem %s0, %s263
        %s265 = smul.u32 2, %s22
      $region36: #{upsample_block.1} parent=31 // pred_fallthru
        _
      // Predicated region
      $region37: #{upsample_block.1} parent=31 // pred_check
        %p266 = pneg %p76
      $region38: #{upsample_block.1} parent=31 // pred_check_branch
        %268 = sbr.rel (%p266) target = $region40
      $region39: #{upsample_block.1} parent=31 // pred_region
        %s269 = smul.u32 2, %s22
        %p270 = scmp.lt.s32.totalorder %s21, 1
        %s271 = scalar_select %p270, %s21, 1
        %p272 = scmp.lt.s32.totalorder %s269, 1
        %s273 = scalar_select %p272, %s269, 1
        %s274 = smul.addr %s271, 8
        %s275 = sadd.s32 %s273, %s274
        %s276 = smul.addr %s275, 8
        %s277 = scalar_lea.vmem %s1, %s276
        %s278 = smul.u32 2, %s22
      $region40: #{upsample_block.1} parent=31 // pred_fallthru
        _
    $region32: #{upsample_block.1} parent=5 // pred_fallthru
      _
    %p279 = scmp.le.s32.totalorder 1, %s14
    %p280 = scmp.lt.s32.totalorder %s14, 3
    %p281 = pnand %p279, %p280
    %p282 = pneg %p281
    // Predicated region
    $region41: #{upsample_block.1} parent=5 // pred_check
      _
    $region42: #{upsample_block.1} parent=5 // pred_check_branch
      %284 = sbr.rel (%p281) target = $region44
    $region43: #{upsample_block.1} parent=5 // pred_region
      %s285 = ssub.s32 %s14, 1
      %s286 = smul.u32 2, %s24
      %p287 = scmp.lt.s32.totalorder %s23, 1
      %s288 = scalar_select %p287, %s23, 1
      %p289 = scmp.lt.s32.totalorder %s286, 1
      %s290 = scalar_select %p289, %s286, 1
      %s291 = smul.addr %s288, 8
      %s292 = sadd.s32 %s290, %s291
      %s293 = smul.addr %s292, 8
      %s294 = scalar_lea.vmem %s0, %s293
      %p295 = pneg %p54
      %p296 = pneg %p51
      %s297 = smul.u32 2, %s24
      %p298 = scmp.lt.s32.totalorder %s23, 1
      %s299 = scalar_select %p298, %s23, 1
      %p300 = scmp.lt.s32.totalorder %s297, 1
      %s301 = scalar_select %p300, %s297, 1
      %s302 = smul.addr %s299, 8
      %s303 = sadd.s32 %s301, %s302
      %s304 = smul.addr %s303, 8
      %s305 = scalar_lea.vmem %s1, %s304
      %p306 = pneg %p82
      %p307 = pneg %p79
      %p308 = pneg %p103
      %p309 = pneg %p100
      %p310 = pneg %p124
      %p311 = pneg %p121
      %p312 = pneg %p145
      %p313 = pneg %p142
      %p314 = pneg %p166
      %p315 = pneg %p163
      %p316 = pneg %p194
      %p317 = pneg %p191
      %s318 = smul.u32 2, %s24
      %p319 = scmp.lt.s32.totalorder %s23, 1
      %s320 = scalar_select %p319, %s23, 1
      %p321 = scmp.lt.s32.totalorder %s318, 1
      %s322 = scalar_select %p321, %s318, 1
      %s323 = smul.addr %s320, 16
      %s324 = sadd.s32 %s322, %s323
      %s325 = smul.addr %s324, 8
      %s326 = scalar_lea.vmem %s6, %s325
      %p327 = pneg %p222
      %p328 = pneg %p219
      %s329 = smul.u32 2, %s24
      %p330 = scmp.lt.s32.totalorder %s23, 1
      %s331 = scalar_select %p330, %s23, 1
      %p332 = scmp.lt.s32.totalorder %s329, 1
      %s333 = scalar_select %p332, %s329, 1
      %s334 = smul.addr %s331, 16
      %s335 = sadd.s32 %s333, %s334
      %s336 = smul.addr %s335, 8
      %s337 = scalar_lea.vmem %s7, %s336
      %s338 = smul.u32 2, %s24
      %p339 = scmp.lt.s32.totalorder %s23, 1
      %s340 = scalar_select %p339, %s23, 1
      %p341 = scmp.lt.s32.totalorder %s338, 1
      %s342 = scalar_select %p341, %s338, 1
      %s343 = smul.addr %s340, 8
      %s344 = sadd.s32 %s342, %s343
      %s345 = smul.addr %s344, 8
      %s346 = scalar_lea.vmem %s0, %s345
      %s347 = smul.u32 2, %s24
      %s348 = smul.u32 2, %s24
      %p349 = scmp.lt.s32.totalorder %s23, 1
      %s350 = scalar_select %p349, %s23, 1
      %p351 = scmp.lt.s32.totalorder %s348, 1
      %s352 = scalar_select %p351, %s348, 1
      %s353 = smul.addr %s350, 8
      %s354 = sadd.s32 %s352, %s353
      %s355 = smul.addr %s354, 8
      %s356 = scalar_lea.vmem %s1, %s355
      %s357 = smul.u32 2, %s24
      %s358 = smul.u32 2, %s24
      %p359 = scmp.lt.s32.totalorder %s23, 1
      %s360 = scalar_select %p359, %s23, 1
      %p361 = scmp.lt.s32.totalorder %s358, 1
      %s362 = scalar_select %p361, %s358, 1
      %s363 = smul.addr %s360, 16
      %s364 = sadd.s32 %s362, %s363
      %s365 = smul.addr %s364, 8
      %s366 = scalar_lea.vmem %s6, %s365
      %s367 = smul.u32 2, %s24
      %s368 = smul.u32 2, %s24
      %p369 = scmp.lt.s32.totalorder %s23, 1
      %s370 = scalar_select %p369, %s23, 1
      %p371 = scmp.lt.s32.totalorder %s368, 1
      %s372 = scalar_select %p371, %s368, 1
      %s373 = smul.addr %s370, 16
      %s374 = sadd.s32 %s372, %s373
      %s375 = smul.addr %s374, 8
      %s376 = scalar_lea.vmem %s7, %s375
      %s377 = smul.u32 2, %s24
      %v378 = vld [vmem:[%s346] sm:$0xff]
      %v379 = vld [vmem:[%s346 + $0x8] sm:$0xff]
      %v380 = vld [vmem:[%s346 + $0x10] sm:$0xff]
      %v381 = vld [vmem:[%s346 + $0x18] sm:$0xff]
      %v382 = vld [vmem:[%s346 + $0x20] sm:$0xff]
      %v383 = vld [vmem:[%s346 + $0x28] sm:$0xff]
      %v384 = vld [vmem:[%s346 + $0x30] sm:$0xff]
      %v385 = vld [vmem:[%s346 + $0x38] sm:$0xff]
      %v386 = vld [vmem:[%s356] sm:$0xff]
      %v387 = vld [vmem:[%s356 + $0x8] sm:$0xff]
      %v388 = vld [vmem:[%s356 + $0x10] sm:$0xff]
      %v389 = vld [vmem:[%s356 + $0x18] sm:$0xff]
      %v390 = vld [vmem:[%s356 + $0x20] sm:$0xff]
      %v391 = vld [vmem:[%s356 + $0x28] sm:$0xff]
      %v392 = vld [vmem:[%s356 + $0x30] sm:$0xff]
      %v393 = vld [vmem:[%s356 + $0x38] sm:$0xff]
      %v394 = vld [vmem:[%s2] sm:$0xff]
      %v395 = vld [vmem:[%s2 + $0x8] sm:$0xff]
      %v396 = vld [vmem:[%s2 + $0x10] sm:$0xff]
      %v397 = vld [vmem:[%s2 + $0x18] sm:$0xff]
      %v398 = vld [vmem:[%s2 + $0x20] sm:$0xff]
      %v399 = vld [vmem:[%s2 + $0x28] sm:$0xff]
      %v400 = vld [vmem:[%s2 + $0x30] sm:$0xff]
      %v401 = vld [vmem:[%s2 + $0x38] sm:$0xff]
      %v402 = vld [vmem:[%s4] sm:$0xff]
      %v403 = vld [vmem:[%s4 + $0x8] sm:$0xff]
      %v404 = vld [vmem:[%s4 + $0x10] sm:$0xff]
      %v405 = vld [vmem:[%s4 + $0x18] sm:$0xff]
      %v406 = vld [vmem:[%s4 + $0x20] sm:$0xff]
      %v407 = vld [vmem:[%s4 + $0x28] sm:$0xff]
      %v408 = vld [vmem:[%s4 + $0x30] sm:$0xff]
      %v409 = vld [vmem:[%s4 + $0x38] sm:$0xff]
      %411 = vset.pattern.permute.xlu0 0
      %412 = vperm.xlu0 %411, %v402
      %v413 = vpop.permute.xlu0 %412
      %416 = vset.pattern.permute.xlu0 0
      %417 = vperm.xlu0 %416, %v403
      %v418 = vpop.permute.xlu0 %417
      %421 = vset.pattern.permute.xlu0 0
      %422 = vperm.xlu0 %421, %v404
      %v423 = vpop.permute.xlu0 %422
      %426 = vset.pattern.permute.xlu0 0
      %427 = vperm.xlu0 %426, %v405
      %v428 = vpop.permute.xlu0 %427
      %431 = vset.pattern.permute.xlu0 0
      %432 = vperm.xlu0 %431, %v406
      %v433 = vpop.permute.xlu0 %432
      %436 = vset.pattern.permute.xlu0 0
      %437 = vperm.xlu0 %436, %v407
      %v438 = vpop.permute.xlu0 %437
      %441 = vset.pattern.permute.xlu0 0
      %442 = vperm.xlu0 %441, %v408
      %v443 = vpop.permute.xlu0 %442
      %446 = vset.pattern.permute.xlu0 0
      %447 = vperm.xlu0 %446, %v409
      %v448 = vpop.permute.xlu0 %447
      %vm450 = vcmask 261120
      %v452 = vsel %vm450, %v394, 0
      %v455 = vsel %vm450, %v395, 0
      %v458 = vsel %vm450, %v396, 0
      %v461 = vsel %vm450, %v397, 0
      %v464 = vsel %vm450, %v398, 0
      %v467 = vsel %vm450, %v399, 0
      %v470 = vsel %vm450, %v400, 0
      %v473 = vsel %vm450, %v401, 0
      %475 = vmatpush.msra.mxu0 0.0
      %476 = vmatpush.msra.mxu0 0.0
      %477 = vmatpush.msra.mxu0 0.0
      %478 = vmatpush.msra.mxu0 0.0
      %479 = vmatpush.msra.mxu0 0.0
      %480 = vmatpush.msra.mxu0 0.0
      %481 = vmatpush.msra.mxu0 0.0
      %482 = vmatpush.msra.mxu0 0.0
      %483 = vmatpush.msra.mxu0 0.0
      %484 = vmatpush.msra.mxu0 0.0
      %485 = vmatpush.msra.mxu0 0.0
      %486 = vmatpush.msra.mxu0 0.0
      %487 = vmatpush.msra.mxu0 %v384
      %488 = vmatpush.msra.mxu0 %v382
      %489 = vmatpush.msra.mxu0 %v380
      %490 = vmatpush.msra.mxu0 %v378
      %491 = vmatmul.f32.gmra.mxu0 %v452
      %v492 = vpop.f32.mrf.mxu0
      %v493 = vadd.f32 %v413, %v492
      %494 = vmatmul.f32.gmra.mxu0 %v455
      %v495 = vpop.f32.mrf.mxu0
      %v496 = vadd.f32 %v418, %v495
      %497 = vmatmul.f32.gmra.mxu0 %v458
      %v498 = vpop.f32.mrf.mxu0
      %v499 = vadd.f32 %v423, %v498
      %500 = vmatmul.f32.gmra.mxu0 %v461
      %v501 = vpop.f32.mrf.mxu0
      %v502 = vadd.f32 %v428, %v501
      %503 = vmatmul.f32.gmra.mxu0 %v464
      %v504 = vpop.f32.mrf.mxu0
      %v505 = vadd.f32 %v433, %v504
      %506 = vmatmul.f32.gmra.mxu0 %v467
      %v507 = vpop.f32.mrf.mxu0
      %v508 = vadd.f32 %v438, %v507
      %509 = vmatmul.f32.gmra.mxu0 %v470
      %v510 = vpop.f32.mrf.mxu0
      %v511 = vadd.f32 %v443, %v510
      %512 = vmatmul.f32.gmra.mxu0 %v473
      %v513 = vpop.f32.mrf.mxu0
      %v514 = vadd.f32 %v448, %v513
      %515 = vdwg.mxu0
      %516 = vmatpush.msra.mxu0 0.0
      %517 = vmatpush.msra.mxu0 0.0
      %518 = vmatpush.msra.mxu0 0.0
      %519 = vmatpush.msra.mxu0 0.0
      %520 = vmatpush.msra.mxu0 0.0
      %521 = vmatpush.msra.mxu0 0.0
      %522 = vmatpush.msra.mxu0 0.0
      %523 = vmatpush.msra.mxu0 0.0
      %524 = vmatpush.msra.mxu0 0.0
      %525 = vmatpush.msra.mxu0 0.0
      %526 = vmatpush.msra.mxu0 0.0
      %527 = vmatpush.msra.mxu0 0.0
      %528 = vmatpush.msra.mxu0 %v385
      %529 = vmatpush.msra.mxu0 %v383
      %530 = vmatpush.msra.mxu0 %v381
      %531 = vmatpush.msra.mxu0 %v379
      %532 = vmatmul.f32.gmra.mxu0 %v452
      %v533 = vpop.f32.mrf.mxu0
      %v534 = vadd.f32 %v413, %v533
      %535 = vmatmul.f32.gmra.mxu0 %v455
      %v536 = vpop.f32.mrf.mxu0
      %v537 = vadd.f32 %v418, %v536
      %538 = vmatmul.f32.gmra.mxu0 %v458
      %v539 = vpop.f32.mrf.mxu0
      %v540 = vadd.f32 %v423, %v539
      %541 = vmatmul.f32.gmra.mxu0 %v461
      %v542 = vpop.f32.mrf.mxu0
      %v543 = vadd.f32 %v428, %v542
      %544 = vmatmul.f32.gmra.mxu0 %v464
      %v545 = vpop.f32.mrf.mxu0
      %v546 = vadd.f32 %v433, %v545
      %547 = vmatmul.f32.gmra.mxu0 %v467
      %v548 = vpop.f32.mrf.mxu0
      %v549 = vadd.f32 %v438, %v548
      %550 = vmatmul.f32.gmra.mxu0 %v470
      %v551 = vpop.f32.mrf.mxu0
      %v552 = vadd.f32 %v443, %v551
      %553 = vmatmul.f32.gmra.mxu0 %v473
      %v554 = vpop.f32.mrf.mxu0
      %v555 = vadd.f32 %v448, %v554
      %556 = vdwg.mxu0
      %v557 = vld [vmem:[%s3] sm:$0xff]
      %v558 = vld [vmem:[%s3 + $0x8] sm:$0xff]
      %v559 = vld [vmem:[%s3 + $0x10] sm:$0xff]
      %v560 = vld [vmem:[%s3 + $0x18] sm:$0xff]
      %v561 = vld [vmem:[%s3 + $0x20] sm:$0xff]
      %v562 = vld [vmem:[%s3 + $0x28] sm:$0xff]
      %v563 = vld [vmem:[%s3 + $0x30] sm:$0xff]
      %v564 = vld [vmem:[%s3 + $0x38] sm:$0xff]
      %v565 = vld [vmem:[%s5] sm:$0xff]
      %v566 = vld [vmem:[%s5 + $0x8] sm:$0xff]
      %v567 = vld [vmem:[%s5 + $0x10] sm:$0xff]
      %v568 = vld [vmem:[%s5 + $0x18] sm:$0xff]
      %v569 = vld [vmem:[%s5 + $0x20] sm:$0xff]
      %v570 = vld [vmem:[%s5 + $0x28] sm:$0xff]
      %v571 = vld [vmem:[%s5 + $0x30] sm:$0xff]
      %v572 = vld [vmem:[%s5 + $0x38] sm:$0xff]
      %574 = vset.pattern.permute.xlu0 0
      %575 = vperm.xlu0 %574, %v565
      %v576 = vpop.permute.xlu0 %575
      %579 = vset.pattern.permute.xlu0 0
      %580 = vperm.xlu0 %579, %v566
      %v581 = vpop.permute.xlu0 %580
      %584 = vset.pattern.permute.xlu0 0
      %585 = vperm.xlu0 %584, %v567
      %v586 = vpop.permute.xlu0 %585
      %589 = vset.pattern.permute.xlu0 0
      %590 = vperm.xlu0 %589, %v568
      %v591 = vpop.permute.xlu0 %590
      %594 = vset.pattern.permute.xlu0 0
      %595 = vperm.xlu0 %594, %v569
      %v596 = vpop.permute.xlu0 %595
      %599 = vset.pattern.permute.xlu0 0
      %600 = vperm.xlu0 %599, %v570
      %v601 = vpop.permute.xlu0 %600
      %604 = vset.pattern.permute.xlu0 0
      %605 = vperm.xlu0 %604, %v571
      %v606 = vpop.permute.xlu0 %605
      %609 = vset.pattern.permute.xlu0 0
      %610 = vperm.xlu0 %609, %v572
      %v611 = vpop.permute.xlu0 %610
      %v614 = vsel %vm450, %v557, 0
      %v617 = vsel %vm450, %v558, 0
      %v620 = vsel %vm450, %v559, 0
      %v623 = vsel %vm450, %v560, 0
      %v626 = vsel %vm450, %v561, 0
      %v629 = vsel %vm450, %v562, 0
      %v632 = vsel %vm450, %v563, 0
      %v635 = vsel %vm450, %v564, 0
      %637 = vmatpush.msra.mxu0 0.0
      %638 = vmatpush.msra.mxu0 0.0
      %639 = vmatpush.msra.mxu0 0.0
      %640 = vmatpush.msra.mxu0 0.0
      %641 = vmatpush.msra.mxu0 0.0
      %642 = vmatpush.msra.mxu0 0.0
      %643 = vmatpush.msra.mxu0 0.0
      %644 = vmatpush.msra.mxu0 0.0
      %645 = vmatpush.msra.mxu0 0.0
      %646 = vmatpush.msra.mxu0 0.0
      %647 = vmatpush.msra.mxu0 0.0
      %648 = vmatpush.msra.mxu0 0.0
      %649 = vmatpush.msra.mxu0 %v392
      %650 = vmatpush.msra.mxu0 %v390
      %651 = vmatpush.msra.mxu0 %v388
      %652 = vmatpush.msra.mxu0 %v386
      %653 = vmatmul.f32.gmra.mxu0 %v614
      %v654 = vpop.f32.mrf.mxu0
      %v655 = vadd.f32 %v576, %v654
      %656 = vmatmul.f32.gmra.mxu0 %v617
      %v657 = vpop.f32.mrf.mxu0
      %v658 = vadd.f32 %v581, %v657
      %659 = vmatmul.f32.gmra.mxu0 %v620
      %v660 = vpop.f32.mrf.mxu0
      %v661 = vadd.f32 %v586, %v660
      %662 = vmatmul.f32.gmra.mxu0 %v623
      %v663 = vpop.f32.mrf.mxu0
      %v664 = vadd.f32 %v591, %v663
      %665 = vmatmul.f32.gmra.mxu0 %v626
      %v666 = vpop.f32.mrf.mxu0
      %v667 = vadd.f32 %v596, %v666
      %668 = vmatmul.f32.gmra.mxu0 %v629
      %v669 = vpop.f32.mrf.mxu0
      %v670 = vadd.f32 %v601, %v669
      %671 = vmatmul.f32.gmra.mxu0 %v632
      %v672 = vpop.f32.mrf.mxu0
      %v673 = vadd.f32 %v606, %v672
      %674 = vmatmul.f32.gmra.mxu0 %v635
      %v675 = vpop.f32.mrf.mxu0
      %v676 = vadd.f32 %v611, %v675
      %677 = vdwg.mxu0
      %678 = vmatpush.msra.mxu0 0.0
      %679 = vmatpush.msra.mxu0 0.0
      %680 = vmatpush.msra.mxu0 0.0
      %681 = vmatpush.msra.mxu0 0.0
      %682 = vmatpush.msra.mxu0 0.0
      %683 = vmatpush.msra.mxu0 0.0
      %684 = vmatpush.msra.mxu0 0.0
      %685 = vmatpush.msra.mxu0 0.0
      %686 = vmatpush.msra.mxu0 0.0
      %687 = vmatpush.msra.mxu0 0.0
      %688 = vmatpush.msra.mxu0 0.0
      %689 = vmatpush.msra.mxu0 0.0
      %690 = vmatpush.msra.mxu0 %v393
      %691 = vmatpush.msra.mxu0 %v391
      %692 = vmatpush.msra.mxu0 %v389
      %693 = vmatpush.msra.mxu0 %v387
      %694 = vmatmul.f32.gmra.mxu0 %v614
      %v695 = vpop.f32.mrf.mxu0
      %v696 = vadd.f32 %v576, %v695
      %697 = vmatmul.f32.gmra.mxu0 %v617
      %v698 = vpop.f32.mrf.mxu0
      %v699 = vadd.f32 %v581, %v698
      %700 = vmatmul.f32.gmra.mxu0 %v620
      %v701 = vpop.f32.mrf.mxu0
      %v702 = vadd.f32 %v586, %v701
      %703 = vmatmul.f32.gmra.mxu0 %v623
      %v704 = vpop.f32.mrf.mxu0
      %v705 = vadd.f32 %v591, %v704
      %706 = vmatmul.f32.gmra.mxu0 %v626
      %v707 = vpop.f32.mrf.mxu0
      %v708 = vadd.f32 %v596, %v707
      %709 = vmatmul.f32.gmra.mxu0 %v629
      %v710 = vpop.f32.mrf.mxu0
      %v711 = vadd.f32 %v601, %v710
      %712 = vmatmul.f32.gmra.mxu0 %v632
      %v713 = vpop.f32.mrf.mxu0
      %v714 = vadd.f32 %v606, %v713
      %715 = vmatmul.f32.gmra.mxu0 %v635
      %v716 = vpop.f32.mrf.mxu0
      %v717 = vadd.f32 %v611, %v716
      %718 = vdwg.mxu0
      %719 = vst [vmem:[%s366] sm:$0xff] %v493
      %720 = vst [vmem:[%s366 + $0x8] sm:$0xff] %v534
      %721 = vst [vmem:[%s366 + $0x10] sm:$0xff] %v496
      %722 = vst [vmem:[%s366 + $0x18] sm:$0xff] %v537
      %723 = vst [vmem:[%s366 + $0x20] sm:$0xff] %v499
      %724 = vst [vmem:[%s366 + $0x28] sm:$0xff] %v540
      %725 = vst [vmem:[%s366 + $0x30] sm:$0xff] %v502
      %726 = vst [vmem:[%s366 + $0x38] sm:$0xff] %v543
      %727 = vst [vmem:[%s366 + $0x40] sm:$0xff] %v505
      %728 = vst [vmem:[%s366 + $0x48] sm:$0xff] %v546
      %729 = vst [vmem:[%s366 + $0x50] sm:$0xff] %v508
      %730 = vst [vmem:[%s366 + $0x58] sm:$0xff] %v549
      %731 = vst [vmem:[%s366 + $0x60] sm:$0xff] %v511
      %732 = vst [vmem:[%s366 + $0x68] sm:$0xff] %v552
      %733 = vst [vmem:[%s366 + $0x70] sm:$0xff] %v514
      %734 = vst [vmem:[%s366 + $0x78] sm:$0xff] %v555
      %735 = vst [vmem:[%s376] sm:$0xff] %v655
      %736 = vst [vmem:[%s376 + $0x8] sm:$0xff] %v696
      %737 = vst [vmem:[%s376 + $0x10] sm:$0xff] %v658
      %738 = vst [vmem:[%s376 + $0x18] sm:$0xff] %v699
      %739 = vst [vmem:[%s376 + $0x20] sm:$0xff] %v661
      %740 = vst [vmem:[%s376 + $0x28] sm:$0xff] %v702
      %741 = vst [vmem:[%s376 + $0x30] sm:$0xff] %v664
      %742 = vst [vmem:[%s376 + $0x38] sm:$0xff] %v705
      %743 = vst [vmem:[%s376 + $0x40] sm:$0xff] %v667
      %744 = vst [vmem:[%s376 + $0x48] sm:$0xff] %v708
      %745 = vst [vmem:[%s376 + $0x50] sm:$0xff] %v670
      %746 = vst [vmem:[%s376 + $0x58] sm:$0xff] %v711
      %747 = vst [vmem:[%s376 + $0x60] sm:$0xff] %v673
      %748 = vst [vmem:[%s376 + $0x68] sm:$0xff] %v714
      %749 = vst [vmem:[%s376 + $0x70] sm:$0xff] %v676
      %750 = vst [vmem:[%s376 + $0x78] sm:$0xff] %v717
      %s751 = smul.u32 2, %s24
      %p752 = scmp.lt.s32.totalorder %s23, 1
      %s753 = scalar_select %p752, %s23, 1
      %p754 = scmp.lt.s32.totalorder %s751, 1
      %s755 = scalar_select %p754, %s751, 1
      %s756 = smul.addr %s753, 16
      %s757 = sadd.s32 %s755, %s756
      %s758 = smul.addr %s757, 8
      %s759 = scalar_lea.vmem %s6, %s758
      %s760 = smul.u32 2, %s24
      %p761 = scmp.lt.s32.totalorder %s23, 1
      %s762 = scalar_select %p761, %s23, 1
      %p763 = scmp.lt.s32.totalorder %s760, 1
      %s764 = scalar_select %p763, %s760, 1
      %s765 = smul.addr %s762, 16
      %s766 = sadd.s32 %s764, %s765
      %s767 = smul.addr %s766, 8
      %s768 = scalar_lea.vmem %s7, %s767
      // Predicated region
      $region45: #{upsample_block.1} parent=43 // pred_check
        %p769 = pneg %p191
      $region46: #{upsample_block.1} parent=43 // pred_check_branch
        %771 = sbr.rel (%p769) target = $region48
      $region47: #{upsample_block.1} parent=43 // pred_region
        %s772 = smul.u32 2, %s24
      $region48: #{upsample_block.1} parent=43 // pred_fallthru
        _
      // Predicated region
      $region49: #{upsample_block.1} parent=43 // pred_check
        %p773 = pneg %p219
      $region50: #{upsample_block.1} parent=43 // pred_check_branch
        %775 = sbr.rel (%p773) target = $region52
      $region51: #{upsample_block.1} parent=43 // pred_region
        %s776 = smul.u32 2, %s24
      $region52: #{upsample_block.1} parent=43 // pred_fallthru
        _
    $region44: #{upsample_block.1} parent=5 // pred_fallthru
      _
    %p777 = scmp.le.s32.totalorder 2, %s14
    // Predicated region
    $region53: #{upsample_block.1} parent=5 // pred_check
      %p778 = pneg %p777
    $region54: #{upsample_block.1} parent=5 // pred_check_branch
      %780 = sbr.rel (%p778) target = $region56
    $region55: #{upsample_block.1} parent=5 // pred_region
      %s781 = ssub.s32 %s14, 2
      // Predicated region
      $region57: #{upsample_block.1} parent=55 // pred_check
        %p782 = pneg %p197
      $region58: #{upsample_block.1} parent=55 // pred_check_branch
        %784 = sbr.rel (%p782) target = $region60
      $region59: #{upsample_block.1} parent=55 // pred_region
        %s785 = smul.u32 2, %s26
        %p786 = scmp.lt.s32.totalorder %s25, 1
        %s787 = scalar_select %p786, %s25, 1
        %p788 = scmp.lt.s32.totalorder %s785, 1
        %s789 = scalar_select %p788, %s785, 1
        %s790 = smul.addr %s787, 16
        %s791 = sadd.s32 %s789, %s790
        %s792 = smul.addr %s791, 8
        %s793 = scalar_lea.vmem %s6, %s792
      $region60: #{upsample_block.1} parent=55 // pred_fallthru
        _
      // Predicated region
      $region61: #{upsample_block.1} parent=55 // pred_check
        %p794 = pneg %p225
      $region62: #{upsample_block.1} parent=55 // pred_check_branch
        %796 = sbr.rel (%p794) target = $region64
      $region63: #{upsample_block.1} parent=55 // pred_region
        %s797 = smul.u32 2, %s26
        %p798 = scmp.lt.s32.totalorder %s25, 1
        %s799 = scalar_select %p798, %s25, 1
        %p800 = scmp.lt.s32.totalorder %s797, 1
        %s801 = scalar_select %p800, %s797, 1
        %s802 = smul.addr %s799, 16
        %s803 = sadd.s32 %s801, %s802
        %s804 = smul.addr %s803, 8
        %s805 = scalar_lea.vmem %s7, %s804
      $region64: #{upsample_block.1} parent=55 // pred_fallthru
        _
    $region56: #{upsample_block.1} parent=5 // pred_fallthru
      _
  $region6: #{upsample_block.1} parent=0 // loop_footer
    %s18 = sadd.s32 1, %s14
  $region7: #{upsample_block.1} parent=0 // loop_footer_branch
    %13 = sbr.rel target = $region3
  $region8: #{upsample_block.1} parent=0 // loop_exit
    _

</llo_original>
